<compile_context>
chip_gen: v7x
topology: tpu7x:2x2x1
jax: 0.10.0
libtpu: 0.0.40
codegen_flags: <defaults>
</compile_context>

<pallas_src>
import functools
import math

import jax
import jax.numpy as jnp
from jax.experimental import pallas as pl
from jax.experimental.pallas import tpu as pltpu

_LANE = 128      # lane width: weight last-dim padding target (lane-dense MXU RHS)
_SUBLANE = 8     # sublane width: row-tile alignment
_MIN_SPLIT = 4   # keep >= this many grid steps when M is large (v7x megacore)
_SPLIT_THRESHOLD = 4096  # only bother splitting the M sweep above this many rows


def _round_up(v, m):
    return ((v + m - 1) // m) * m


def _linear_kernel(x_ref, w_ref, b_ref, o_ref):
    # x_ref: (tm, F)   w_ref: (F, n_pad)   b_ref: (1, N)   o_ref: (tm, N)
    acc = jnp.dot(x_ref[...], w_ref[...], preferred_element_type=jnp.float32)
    n = o_ref.shape[-1]
    # Padded weight columns are zero, so dropping them before the bias add is
    # exact; the store is masked (N < 128 lanes) but the kernel is DMA-bound.
    o_ref[...] = (acc[:, :n] + b_ref[...].astype(jnp.float32)).astype(o_ref.dtype)


@functools.partial(jax.jit, static_argnames=("block_m",))
def discriminator_forward(x, weight, bias, *, block_m=4096):
    """Pallas equivalent of Discriminator.forward.

    x:      (..., size_factor)
    weight: (num_ents, size_factor)   -- PyTorch nn.Linear layout
    bias:   (num_ents,)
    returns (..., num_ents)
    """
    size_factor = x.shape[-1]
    num_ents = weight.shape[0]

    lead_shape = x.shape[:-1]
    m = math.prod(lead_shape) if lead_shape else 1
    x2d = x.reshape(m, size_factor)

    # Pad N up to a multiple of 128 and pre-transpose once -> (F, n_pad)
    # lane-dense MXU RHS. W is tiny (~KiB) so this one-time transform is free.
    n_pad = _round_up(num_ents, _LANE)
    w_t = jnp.pad(weight, ((0, n_pad - num_ents), (0, 0))).T  # (F, n_pad)
    b2d = bias.reshape(1, num_ents)

    # Row tile: multiple of 8, capped at block_m; Pallas masks the partial
    # last tile when m % tm != 0.
    tm = _round_up(max(min(block_m, m), 1), _SUBLANE)
    # When the problem is big, keep at least _MIN_SPLIT grid steps so the
    # "parallel" M axis can be sharded across v7x's two TensorCores.
    if m >= _SPLIT_THRESHOLD:
        tm = min(tm, _round_up(pl.cdiv(m, _MIN_SPLIT), _SUBLANE))
    grid_m = pl.cdiv(m, tm)

    itemsize = jnp.dtype(x.dtype).itemsize
    cost = pl.CostEstimate(
        flops=2 * m * size_factor * n_pad,
        transcendentals=0,
        bytes_accessed=(m * size_factor          # x read
                        + size_factor * n_pad    # W read (resident)
                        + num_ents               # bias read
                        + m * num_ents) * itemsize,  # unpadded out write
    )

    out2d = pl.pallas_call(
        _linear_kernel,
        out_shape=jax.ShapeDtypeStruct((m, num_ents), x.dtype),
        grid_spec=pltpu.PrefetchScalarGridSpec(
            num_scalar_prefetch=0,
            grid=(grid_m,),
            in_specs=[
                pl.BlockSpec((tm, size_factor), lambda i: (i, 0)),      # x tile
                pl.BlockSpec((size_factor, n_pad), lambda i: (0, 0)),   # W resident
                pl.BlockSpec((1, num_ents), lambda i: (0, 0)),          # bias resident
            ],
            # Last dim == full array extent (num_ents), so no 128-padding
            # needed and no wrapper-side slice pass over HBM.
            out_specs=pl.BlockSpec((tm, num_ents), lambda i: (i, 0)),
        ),
        compiler_params=pltpu.CompilerParams(
            dimension_semantics=("parallel",),
        ),
        cost_estimate=cost,
    )(x2d, w_t, b2d)

    return out2d.reshape(*lead_shape, num_ents)


if __name__ == "__main__":
    # Small shapes consistent with the module: size_factor=32, num_ents=16,
    # input x of shape (batch=2, seq=8, size_factor=32).
    size_factor = 32
    num_ents = 16
    batch, seq = 2, 8

    key = jax.random.PRNGKey(0)
    kx, kw, kb = jax.random.split(key, 3)

    # Deterministic parameter init (mirrors nn.Linear's uniform(-1/sqrt(F), 1/sqrt(F))).
    bound = 1.0 / (size_factor ** 0.5)
    weight = jax.random.uniform(
        kw, (num_ents, size_factor), jnp.float32, minval=-bound, maxval=bound
    )
    bias = jax.random.uniform(
        kb, (num_ents,), jnp.float32, minval=-bound, maxval=bound
    )
    x = jax.random.normal(kx, (batch, seq, size_factor), jnp.float32)

    out = discriminator_forward(x, weight, bias)
    out = jax.block_until_ready(out)

    # Sanity check against plain-JAX reference.
    ref = x @ weight.T + bias
    assert out.shape == (batch, seq, num_ents)
    assert jnp.allclose(out, ref, atol=1e-5, rtol=1e-5)

    print("KERNEL_OK")
</pallas_src>

<mosaic_0001>
module attributes {stable_mosaic.version = 11 : i64} {
  func.func @_linear_kernel(%arg0: i32, %arg1: memref<16x32xf32, #tpu.memory_space<vmem>>, %arg2: memref<32x128xf32, #tpu.memory_space<vmem>>, %arg3: memref<1x16xf32, #tpu.memory_space<vmem>>, %arg4: memref<16x16xf32, #tpu.memory_space<vmem>>) attributes {dimension_semantics = [#tpu.dimension_semantics<parallel>], iteration_bounds = array<i64: 1>, scalar_prefetch = 0 : i64, scratch_operands = 0 : i64, tpu.core_type = #tpu.core_type<tc>, window_params = [{transform_indices = @transform_0, window_bounds = array<i64: 16, 32>}, {pipeline_mode = #tpu.pipeline_mode<synchronous>, transform_indices = @transform_1, window_bounds = array<i64: 32, 128>}, {pipeline_mode = #tpu.pipeline_mode<synchronous>, transform_indices = @transform_2, window_bounds = array<i64: 1, 16>}, {transform_indices = @transform_3, window_bounds = array<i64: 16, 16>}]} {
    %c0 = arith.constant 0 : index
    %c0_0 = arith.constant 0 : index
    %0 = vector.load %arg1[%c0, %c0_0] : memref<16x32xf32, #tpu.memory_space<vmem>>, vector<16x32xf32>
    %c0_1 = arith.constant 0 : index
    %c0_2 = arith.constant 0 : index
    %1 = vector.load %arg2[%c0_1, %c0_2] : memref<32x128xf32, #tpu.memory_space<vmem>>, vector<32x128xf32>
    %cst = arith.constant dense<0.000000e+00> : vector<16x128xf32>
    %2 = tpu.matmul %0, %1, %cst {dimension_numbers = #tpu.dot_dimension_numbers<[1], [0], [0], [1], [0, 0, 1, 1], [], []>} : vector<16x32xf32>, vector<32x128xf32>, vector<16x128xf32> -> vector<16x128xf32>
    %3 = vector.extract_strided_slice %2 {offsets = [0, 0], sizes = [16, 16], strides = [1, 1]} : vector<16x128xf32> to vector<16x16xf32>
    %c0_3 = arith.constant 0 : index
    %c0_4 = arith.constant 0 : index
    %4 = vector.load %arg3[%c0_3, %c0_4] : memref<1x16xf32, #tpu.memory_space<vmem>>, vector<1x16xf32>
    %5 = vector.broadcast %4 : vector<1x16xf32> to vector<16x16xf32>
    %6 = arith.addf %3, %5 : vector<16x16xf32>
    %c0_5 = arith.constant 0 : index
    %c0_6 = arith.constant 0 : index
    %7 = vector.load %arg4[%c0_5, %c0_6] : memref<16x16xf32, #tpu.memory_space<vmem>>, vector<16x16xf32>
    tpu.vector_store %arg4[%c0_5, %c0_6], %6 {strides = array<i32>} : memref<16x16xf32, #tpu.memory_space<vmem>>, vector<16x16xf32>,
    return
  }
  func.func @transform_0(%arg0: i32) -> (i32, i32) {
    %c0_i32 = arith.constant 0 : i32
    %c0_i32_0 = arith.constant 0 : i32
    return %arg0, %c0_i32 : i32, i32
  }
  func.func @transform_1(%arg0: i32) -> (i32, i32) {
    %c0_i32 = arith.constant 0 : i32
    %c0_i32_0 = arith.constant 0 : i32
    %c0_i32_1 = arith.constant 0 : i32
    return %c0_i32, %c0_i32_0 : i32, i32
  }
  func.func @transform_2(%arg0: i32) -> (i32, i32) {
    %c0_i32 = arith.constant 0 : i32
    %c0_i32_0 = arith.constant 0 : i32
    %c0_i32_1 = arith.constant 0 : i32
    return %c0_i32, %c0_i32_0 : i32, i32
  }
  func.func @transform_3(%arg0: i32) -> (i32, i32) {
    %c0_i32 = arith.constant 0 : i32
    %c0_i32_0 = arith.constant 0 : i32
    return %arg0, %c0_i32 : i32, i32
  }
}

</mosaic_0001>

<llo_original>
// kernel: discriminator_forward.1
$region0: #{discriminator_forward.1}
  #allocation0 [shape = 'u32[]', space=smem, size = 0x4, offset = 0x4, fixed_abs, tag = 'smem constant byte address 0x4 - core index']
  #allocation1 [shape = 'u32[144,128]{1,0:T(1,128)}', space=vmem, size = 0x12000, scoped, tag = 'internal scratch']
  %s0 = inlined_call_operand.vmem [shape: f32[16,32], index: 0, kind: input, shape index: {}]
  %s1 = inlined_call_operand.vmem [shape: f32[32,128], index: 1, kind: input, shape index: {}]
  %s2 = inlined_call_operand.vmem [shape: f32[1,16], index: 2, kind: input, shape index: {}]
  %s3 = inlined_call_operand.hbm [shape: f32[16,16], index: 3, kind: output, shape index: {}]
  %s4 = sld [smem:[#allocation0]]
  $region22: #{discriminator_forward.1} parent=0
    _
  %s6 = ssub.s32 1, %s4
  %s7 = scalar_select 0, %s6, %s4
  $region1: #{discriminator_forward.1} parent=0
    #allocation2 [shape = 'u8[8192]{0}', space=vmem, size = 0x2000, scoped, tag = 'output window, operand 0, single buffered']
    #allocation3 [shape = 's32[1]{0}', space=sflag, size = 0x4, scoped, tag = 'scoped memory for discriminator_forward.1']
    %8 = vsyncpa [#allocation3], 0
    // Predicated region
    $region2: #{discriminator_forward.1} parent=1 // pred_check
      _
    $region3: #{discriminator_forward.1} parent=1 // pred_check_branch
      %10 = sbr.rel (0) target = $region5
    $region4: #{discriminator_forward.1} parent=1 // pred_region
      _
    $region5: #{discriminator_forward.1} parent=1 // pred_fallthru
      _
    // Predicated region
    $region6: #{discriminator_forward.1} parent=1 // pred_check
      _
    $region7: #{discriminator_forward.1} parent=1 // pred_check_branch
      %12 = sbr.rel (0) target = $region9
    $region8: #{discriminator_forward.1} parent=1 // pred_region
      _
    $region9: #{discriminator_forward.1} parent=1 // pred_fallthru
      _
    // Predicated region
    $region10: #{discriminator_forward.1} parent=1 // pred_check
      _
    $region11: #{discriminator_forward.1} parent=1 // pred_check_branch
      %14 = sbr.rel (0) target = $region13
    $region12: #{discriminator_forward.1} parent=1 // pred_region
      _
    $region13: #{discriminator_forward.1} parent=1 // pred_fallthru
      _
    %v15 = vld [vmem:[%s0] sm:$0xff]
    %v16 = vld [vmem:[%s0 + $0x8] sm:$0xff]
    %v17 = vld [vmem:[%s1] sm:$0xff]
    %v18 = vld [vmem:[%s1 + $0x8] sm:$0xff]
    %v19 = vld [vmem:[%s1 + $0x10] sm:$0xff]
    %v20 = vld [vmem:[%s1 + $0x18] sm:$0xff]
    %vm21 = vcmask 261120
    %v23 = vsel %vm21, %v15, 0
    %v26 = vsel %vm21, %v16, 0
    %28 = vmatprep.subr.mxu0 0.0
    %29 = vmatpush1.msra.mxu0 %v17
    %30 = vmatprep.subr.mxu0 0.0
    %31 = vmatpush1.msra.mxu0 %v18
    %32 = vmatprep.subr.mxu0 0.0
    %33 = vmatpush1.msra.mxu0 %v19
    %34 = vmatprep.subr.mxu0 0.0
    %35 = vmatpush1.msra.mxu0 %v20
    %36 = vmatprep.subr.mxu0 0.0
    %37 = vmatpush1.msra.mxu0 0.0
    %38 = vmatprep.subr.mxu0 0.0
    %39 = vmatpush1.msra.mxu0 0.0
    %40 = vmatprep.subr.mxu0 0.0
    %41 = vmatpush1.msra.mxu0 0.0
    %42 = vmatprep.subr.mxu0 0.0
    %43 = vmatpush1.msra.mxu0 0.0
    %44 = vmatprep.subr.mxu0 0.0
    %45 = vmatpush1.msra.mxu0 0.0
    %46 = vmatprep.subr.mxu0 0.0
    %47 = vmatpush1.msra.mxu0 0.0
    %48 = vmatprep.subr.mxu0 0.0
    %49 = vmatpush1.msra.mxu0 0.0
    %50 = vmatprep.subr.mxu0 0.0
    %51 = vmatpush1.msra.mxu0 0.0
    %52 = vmatprep.subr.mxu0 0.0
    %53 = vmatpush1.msra.mxu0 0.0
    %54 = vmatprep.subr.mxu0 0.0
    %55 = vmatpush1.msra.mxu0 0.0
    %56 = vmatprep.subr.mxu0 0.0
    %57 = vmatpush1.msra.mxu0 0.0
    %58 = vmatprep.subr.mxu0 0.0
    %59 = vmatpush1.msra.mxu0 0.0
    %60 = vmatprep.subr.mxu0 0.0
    %61 = vmatpush1.msra.mxu0 0.0
    %62 = vmatprep.subr.mxu0 0.0
    %63 = vmatpush1.msra.mxu0 0.0
    %64 = vmatprep.subr.mxu0 0.0
    %65 = vmatpush1.msra.mxu0 0.0
    %66 = vmatprep.subr.mxu0 0.0
    %67 = vmatpush1.msra.mxu0 0.0
    %68 = vmatprep.subr.mxu0 0.0
    %69 = vmatpush1.msra.mxu0 0.0
    %70 = vmatprep.subr.mxu0 0.0
    %71 = vmatpush1.msra.mxu0 0.0
    %72 = vmatprep.subr.mxu0 0.0
    %73 = vmatpush1.msra.mxu0 0.0
    %74 = vmatprep.subr.mxu0 0.0
    %75 = vmatpush1.msra.mxu0 0.0
    %76 = vmatprep.subr.mxu0 0.0
    %77 = vmatpush1.msra.mxu0 0.0
    %78 = vmatprep.subr.mxu0 0.0
    %79 = vmatpush1.msra.mxu0 0.0
    %80 = vmatprep.subr.mxu0 0.0
    %81 = vmatpush1.msra.mxu0 0.0
    %82 = vmatprep.subr.mxu0 0.0
    %83 = vmatpush1.msra.mxu0 0.0
    %84 = vmatprep.subr.mxu0 0.0
    %85 = vmatpush1.msra.mxu0 0.0
    %86 = vmatprep.subr.mxu0 0.0
    %87 = vmatpush1.msra.mxu0 0.0
    %88 = vmatprep.subr.mxu0 0.0
    %89 = vmatpush1.msra.mxu0 0.0
    %90 = vmatprep.subr.mxu0 0.0
    %91 = vmatpush1.msra.mxu0 0.0
    %92 = vmatprep.mubr.f32.mxu0 0.0
    %93 = vmatmul.mubr.f32.gmra.mrb[0].mxu0 %v23
    %v94 = vpop.f32.mrb[0].mxu0
    %v95 = vadd.f32 0.0, %v94
    %v96 = vpop.f32.mrb[0].mxu0
    %97 = vmatprep.mubr.f32.mxu0 0.0
    %98 = vmatmul.mubr.f32.gmra.mrb[0].mxu0 %v26
    %v99 = vpop.f32.mrb[0].mxu0
    %v100 = vadd.f32 0.0, %v99
    %v101 = vpop.f32.mrb[0].mxu0
    %102 = vdwg.mxu0
    %v103 = vld [vmem:[%s2] sm:$0x1]
    %v105 = vlaneseq
    %v106 = vshrl.u32 %v105, 7
    %v107 = vsub.s32 0, %v106
    %v108 = vrot.slane %v103, %v107
    %v110 = vadd.f32 %v95, %v108
    %v111 = vadd.f32 %v100, %v108
    %vm112 = vcmask 130048
    %113 = vst.msk [vmem:[#allocation2] sm:$0xff] %vm112, %v110
    %114 = vst.msk [vmem:[#allocation2 + $0x8] sm:$0xff] %vm112, %v111
    // Predicated region
    $region14: #{discriminator_forward.1} parent=1 // pred_check
      _
    $region15: #{discriminator_forward.1} parent=1 // pred_check_branch
      %116 = sbr.rel (0) target = $region17
    $region16: #{discriminator_forward.1} parent=1 // pred_region
      %s118 = ssub.s32 256, 256
      %119 = vsyncadd [#allocation3], %s118
      %s120 = sshll.u32 [#allocation2], 4
      %s121 = int_to_ptr.vmem [resolvable:$true] %s120
      %126 = dma.vmem_to_hbm [thread:$0]  %s121, 256, %s3, [#allocation3], 128, 128, 8
    $region17: #{discriminator_forward.1} parent=1 // pred_fallthru
      _
    // Predicated region
    $region18: #{discriminator_forward.1} parent=1 // pred_check
      _
    $region19: #{discriminator_forward.1} parent=1 // pred_check_branch
      %128 = sbr.rel (0) target = $region21
    $region20: #{discriminator_forward.1} parent=1 // pred_region
      %129 = dma.done [#allocation3], 256
    $region21: #{discriminator_forward.1} parent=1 // pred_fallthru
      _
    %130 = vsyncpa [#allocation3], 1

</llo_original>
